<compile_context>
chip_gen: v5e
topology: v5e:2x2
jax: 0.10.0
libtpu: 0.0.40
codegen_flags: <defaults>
</compile_context>

<pallas_src>
import functools
import math

import numpy as np
import jax
import jax.numpy as jnp
from jax.experimental import pallas as pl
from jax.experimental.pallas import tpu as pltpu


# -----------------------------------------------------------------------------
# Deterministic "audfilters"-style Gabor filterbank (synthetic init; shapes
# match the module: kernels (num_channels, kernel_max), complex -> real/imag).
# TODO(synk): exact audfilters() mel-bandwidth/stride derivation not reproduced;
#             deterministic mel-spaced Gabor atoms of identical shape are used.
# -----------------------------------------------------------------------------
def make_isac_filters(num_channels: int, kernel_max: int, fs: int,
                      fc_min: float = 100.0, fc_max: float | None = None):
    if fc_max is None:
        fc_max = 0.8 * fs / 2.0

    def hz_to_mel(f):
        return 2595.0 * np.log10(1.0 + f / 700.0)

    def mel_to_hz(m):
        return 700.0 * (10.0 ** (m / 2595.0) - 1.0)

    mels = np.linspace(hz_to_mel(fc_min), hz_to_mel(fc_max), num_channels)
    fc = mel_to_hz(mels)
    n = np.arange(kernel_max, dtype=np.float64) - kernel_max / 2.0
    win = np.hanning(kernel_max)
    kr = np.stack([win * np.cos(2.0 * np.pi * f * n / fs) for f in fc])
    ki = np.stack([win * np.sin(2.0 * np.pi * f * n / fs) for f in fc])
    norm = np.sqrt(np.sum(kr ** 2 + ki ** 2, axis=1, keepdims=True)) + 1e-8
    kr = (kr / norm).astype(np.float32)
    ki = (ki / norm).astype(np.float32)
    return jnp.asarray(kr), jnp.asarray(ki), fc


# -----------------------------------------------------------------------------
# Pallas kernel.
#   xa_ref : (1, s, TT)   time-tile j of the phase-split signal
#   xb_ref : (1, s, OV)   small overlap window starting at column (j+1)*TT
#   w_ref  : (2*Cp, Kp)   fused [real; imag] filters (resident)
#   or_ref : (1, Cp, TT)  real output tile (time on lanes)
#   oi_ref : (1, Cp, TT)  imag output tile
# -----------------------------------------------------------------------------
def _isac_kernel(xa_ref, xb_ref, w_ref, or_ref, oi_ref, *, Qpad, QC, s, TT, Cp):
    xa = xa_ref[0]                                      # (s, TT)
    xb = xb_ref[0]                                      # (s, OV)
    xcat = jnp.concatenate([xa, xb], axis=1)            # (s, TT + OV)
    w = w_ref[...]                                      # (2*Cp, Kp)

    # Bounded im2col: process Q tap-groups in chunks of QC (QC*s is a multiple
    # of 8 sublanes), accumulating the MXU matmul in f32.  In-VMEM im2col:
    #   frames[q*s + r, t] = x_pad[(tile0 + t + q)*s + r]
    nQC = Qpad // QC
    acc = None
    for c in range(nQC):
        q0 = c * QC
        frames = jnp.concatenate(
            [xcat[:, q0 + q:q0 + q + TT] for q in range(QC)], axis=0)  # (QC*s, TT)
        wc = w[:, q0 * s:(q0 + QC) * s]                                # (2*Cp, QC*s)
        part = jnp.dot(wc, frames, preferred_element_type=jnp.float32)
        acc = part if acc is None else acc + part

    or_ref[0] = acc[:Cp]
    oi_ref[0] = acc[Cp:]


def isac_forward(x, kernels_real, kernels_imag, stride, kernel_max):
    """x: (B, L) float32 -> complex64 (B, C, T), T = (L + 2*(K//2) - K)//stride + 1."""
    B, L = x.shape
    C, K = kernels_real.shape
    assert K == kernel_max
    s = int(stride)
    pad = kernel_max // 2

    # Circular padding (matches F.pad(..., mode='circular') on the last dim).
    x_pad = jnp.concatenate([x[:, L - pad:], x, x[:, :pad]], axis=1)   # (B, Lp)
    Lp = L + 2 * pad
    T = (Lp - K) // s + 1

    # --- Tap-group (polyphase) chunking: k = q*s + r, r in [0, s). ----------
    Q = -(-K // s)
    g = 8 // math.gcd(s, 8)            # smallest q-group giving 8-aligned rows
    QC = g
    while QC * s < 64 and QC * 2 * s <= 128:
        QC *= 2                        # grow chunk to ~64-128 sublanes
    while QC // 2 >= g and QC // 2 >= Q:
        QC //= 2                       # don't overshoot tiny Q
    Qpad = -(-Q // QC) * QC
    Kp = Qpad * s                      # zero-padded taps (harmless on MXU)

    # Overlap window width (lanes of tile j+1 actually needed), >= Qpad-1.
    OV = max(128, pl.next_power_of_2(max(Qpad - 1, 1)))

    # --- Time-tile size (lane axis). ----------------------------------------
    Tpow = max(128, pl.next_power_of_2(T))
    TT = 128
    while TT < 4096 and TT * 2 <= Tpow:
        TT *= 2
    TT = max(TT, OV)                   # OV must divide TT (both pow2 * 128)
    # v7x: make sure the (parallel) grid has >= 2 steps when possible.
    while TT > max(128, OV) and B * (-(-T // TT)) < 2:
        TT //= 2
    nT = -(-T // TT)
    T_pad = nT * TT

    # --- Phase-split signal: X2T[b, r, m] = x_ext[b, m*s + r]. --------------
    # Zero-pad so tile nT-1 plus its OV-wide overlap window stay in bounds.
    ncols = max(nT * TT + OV, -(-Lp // s))
    Lext = ncols * s
    x_ext = jnp.concatenate(
        [x_pad, jnp.zeros((B, Lext - Lp), dtype=x_pad.dtype)], axis=1)
    # TODO(synk): this transpose is one extra HBM pass over the padded signal.
    x2t = x_ext.reshape(B, ncols, s).transpose(0, 2, 1)      # (B, s, ncols)

    # --- Fused real/imag weights, zero-padded to (2*Cp, Kp). ----------------
    Cp = -(-C // 8) * 8
    w = jnp.zeros((2 * Cp, Kp), dtype=jnp.float32)
    w = w.at[:C, :K].set(kernels_real.astype(jnp.float32))
    w = w.at[Cp:Cp + C, :K].set(kernels_imag.astype(jnp.float32))

    flops = 2 * B * nT * (2 * Cp) * Kp * TT
    bytes_accessed = 4 * (B * nT * s * (TT + OV)      # input tiles (overlap fixed)
                          + 2 * Cp * Kp               # resident weights
                          + 2 * B * Cp * T_pad)       # two planar outputs

    out_r, out_i = pl.pallas_call(
        functools.partial(_isac_kernel, Qpad=Qpad, QC=QC, s=s, TT=TT, Cp=Cp),
        grid=(B, nT),
        in_specs=[
            pl.BlockSpec((1, s, TT), lambda b, j: (b, 0, j)),                      # tile j
            pl.BlockSpec((1, s, OV), lambda b, j: (b, 0, (j + 1) * (TT // OV))),   # overlap
            pl.BlockSpec((2 * Cp, Kp), lambda b, j: (0, 0)),                       # weights
        ],
        out_specs=[
            pl.BlockSpec((1, Cp, TT), lambda b, j: (b, 0, j)),
            pl.BlockSpec((1, Cp, TT), lambda b, j: (b, 0, j)),
        ],
        out_shape=[
            jax.ShapeDtypeStruct((B, Cp, T_pad), jnp.float32),
            jax.ShapeDtypeStruct((B, Cp, T_pad), jnp.float32),
        ],
        compiler_params=pltpu.CompilerParams(
            dimension_semantics=("parallel", "parallel")),
        cost_estimate=pl.CostEstimate(
            flops=flops, transcendentals=0, bytes_accessed=bytes_accessed),
    )(x2t, x2t, w)

    # The slice below fuses into the (unavoidable, module returns complex)
    # complex64 pack in XLA — no separate output pass.
    out_real = out_r[:, :C, :T]
    out_imag = out_i[:, :C, :T]
    return jax.lax.complex(out_real, out_imag)


# -----------------------------------------------------------------------------
# Reference (independent): lax.conv_general_dilated, NCW, cross-correlation —
# identical semantics to torch.nn.functional.conv1d.
# -----------------------------------------------------------------------------
def isac_forward_ref(x, kernels_real, kernels_imag, stride, kernel_max):
    B, L = x.shape
    pad = kernel_max // 2
    x_pad = jnp.concatenate([x[:, L - pad:], x, x[:, :pad]], axis=1)
    lhs = x_pad[:, None, :]                      # (B, 1, Lp)
    rhs_r = kernels_real[:, None, :]             # (C, 1, K)
    rhs_i = kernels_imag[:, None, :]
    dn = ("NCH", "OIH", "NCH")
    out_r = jax.lax.conv_general_dilated(lhs, rhs_r, (stride,), "VALID",
                                         dimension_numbers=dn,
                                         precision=jax.lax.Precision.HIGHEST)
    out_i = jax.lax.conv_general_dilated(lhs, rhs_i, (stride,), "VALID",
                                         dimension_numbers=dn,
                                         precision=jax.lax.Precision.HIGHEST)
    return jax.lax.complex(out_r, out_i)


def _run_case(key, B, L, C, K, stride, fs=16000):
    kernels_real, kernels_imag, _fc = make_isac_filters(C, K, fs)
    x = jax.random.normal(key, (B, L), dtype=jnp.float32)

    out = isac_forward(x, kernels_real, kernels_imag, stride, K)
    out = jax.block_until_ready(out)

    ref = isac_forward_ref(x, kernels_real, kernels_imag, stride, K)
    ref = jax.block_until_ready(ref)

    assert out.shape == ref.shape, (out.shape, ref.shape)
    assert out.dtype == jnp.complex64, out.dtype
    np.testing.assert_allclose(np.real(out), np.real(ref), rtol=1e-4, atol=1e-4)
    np.testing.assert_allclose(np.imag(out), np.imag(ref), rtol=1e-4, atol=1e-4)


if __name__ == "__main__":
    key = jax.random.PRNGKey(0)
    k1, k2 = jax.random.split(key)

    # Case 1: small forward-consistent shapes (stride divides K, T not a
    # multiple of the time tile).
    _run_case(k1, B=2, L=256, C=8, K=32, stride=4)

    # Case 2: tail/padding lock-in — stride does not divide K, C not a
    # multiple of 8, B=1.
    _run_case(k2, B=1, L=250, C=5, K=32, stride=3)

    print("KERNEL_OK")
</pallas_src>

<mosaic_0001>
module attributes {stable_mosaic.version = 11 : i64} {
  func.func @_isac_kernel(%arg0: i32, %arg1: i32, %arg2: memref<1x4x128xf32, #tpu.memory_space<vmem>>, %arg3: memref<1x4x128xf32, #tpu.memory_space<vmem>>, %arg4: memref<16x32xf32, #tpu.memory_space<vmem>>, %arg5: memref<1x8x128xf32, #tpu.memory_space<vmem>>, %arg6: memref<1x8x128xf32, #tpu.memory_space<vmem>>) attributes {dimension_semantics = [#tpu.dimension_semantics<parallel>, #tpu.dimension_semantics<parallel>], iteration_bounds = array<i64: 2, 1>, scalar_prefetch = 0 : i64, scratch_operands = 0 : i64, tpu.core_type = #tpu.core_type<tc>, window_params = [{transform_indices = @transform_0, window_bounds = array<i64: 1, 4, 128>}, {transform_indices = @transform_1, window_bounds = array<i64: 1, 4, 128>}, {pipeline_mode = #tpu.pipeline_mode<synchronous>, transform_indices = @transform_2, window_bounds = array<i64: 16, 32>}, {transform_indices = @transform_3, window_bounds = array<i64: 1, 8, 128>}, {transform_indices = @transform_4, window_bounds = array<i64: 1, 8, 128>}]} {
    %c0 = arith.constant 0 : index
    %c0_0 = arith.constant 0 : index
    %c0_1 = arith.constant 0 : index
    %0 = vector.load %arg2[%c0, %c0_0, %c0_1] : memref<1x4x128xf32, #tpu.memory_space<vmem>>, vector<1x4x128xf32>
    %1 = vector.shape_cast %0 : vector<1x4x128xf32> to vector<4x128xf32>
    %c0_2 = arith.constant 0 : index
    %c0_3 = arith.constant 0 : index
    %c0_4 = arith.constant 0 : index
    %2 = vector.load %arg3[%c0_2, %c0_3, %c0_4] : memref<1x4x128xf32, #tpu.memory_space<vmem>>, vector<1x4x128xf32>
    %3 = vector.shape_cast %2 : vector<1x4x128xf32> to vector<4x128xf32>
    %4 = tpu.concatenate %1, %3 in 1 : vector<4x128xf32>, vector<4x128xf32> -> vector<4x256xf32>
    %c0_5 = arith.constant 0 : index
    %c0_6 = arith.constant 0 : index
    %5 = vector.load %arg4[%c0_5, %c0_6] : memref<16x32xf32, #tpu.memory_space<vmem>>, vector<16x32xf32>
    %6 = vector.extract_strided_slice %4 {offsets = [0, 0], sizes = [4, 128], strides = [1, 1]} : vector<4x256xf32> to vector<4x128xf32>
    %7 = vector.extract_strided_slice %4 {offsets = [0, 1], sizes = [4, 128], strides = [1, 1]} : vector<4x256xf32> to vector<4x128xf32>
    %8 = vector.extract_strided_slice %4 {offsets = [0, 2], sizes = [4, 128], strides = [1, 1]} : vector<4x256xf32> to vector<4x128xf32>
    %9 = vector.extract_strided_slice %4 {offsets = [0, 3], sizes = [4, 128], strides = [1, 1]} : vector<4x256xf32> to vector<4x128xf32>
    %10 = vector.extract_strided_slice %4 {offsets = [0, 4], sizes = [4, 128], strides = [1, 1]} : vector<4x256xf32> to vector<4x128xf32>
    %11 = vector.extract_strided_slice %4 {offsets = [0, 5], sizes = [4, 128], strides = [1, 1]} : vector<4x256xf32> to vector<4x128xf32>
    %12 = vector.extract_strided_slice %4 {offsets = [0, 6], sizes = [4, 128], strides = [1, 1]} : vector<4x256xf32> to vector<4x128xf32>
    %13 = vector.extract_strided_slice %4 {offsets = [0, 7], sizes = [4, 128], strides = [1, 1]} : vector<4x256xf32> to vector<4x128xf32>
    %14 = tpu.concatenate %6, %7, %8, %9, %10, %11, %12, %13 in 0 : vector<4x128xf32>, vector<4x128xf32>, vector<4x128xf32>, vector<4x128xf32>, vector<4x128xf32>, vector<4x128xf32>, vector<4x128xf32>, vector<4x128xf32> -> vector<32x128xf32>
    %cst = arith.constant dense<0.000000e+00> : vector<16x128xf32>
    %15 = tpu.matmul %5, %14, %cst {dimension_numbers = #tpu.dot_dimension_numbers<[1], [0], [0], [1], [0, 0, 1, 1], [], []>} : vector<16x32xf32>, vector<32x128xf32>, vector<16x128xf32> -> vector<16x128xf32>
    %16 = vector.extract_strided_slice %15 {offsets = [0, 0], sizes = [8, 128], strides = [1, 1]} : vector<16x128xf32> to vector<8x128xf32>
    %c0_7 = arith.constant 0 : index
    %c0_8 = arith.constant 0 : index
    %c0_9 = arith.constant 0 : index
    %17 = vector.load %arg5[%c0_7, %c0_8, %c0_9] : memref<1x8x128xf32, #tpu.memory_space<vmem>>, vector<1x8x128xf32>
    %18 = vector.shape_cast %17 : vector<1x8x128xf32> to vector<8x128xf32>
    %19 = vector.shape_cast %16 : vector<8x128xf32> to vector<1x8x128xf32>
    tpu.vector_store %arg5[%c0_7, %c0_8, %c0_9], %19 {strides = array<i32>} : memref<1x8x128xf32, #tpu.memory_space<vmem>>, vector<1x8x128xf32>,
    %20 = vector.extract_strided_slice %15 {offsets = [8, 0], sizes = [8, 128], strides = [1, 1]} : vector<16x128xf32> to vector<8x128xf32>
    %c0_10 = arith.constant 0 : index
    %c0_11 = arith.constant 0 : index
    %c0_12 = arith.constant 0 : index
    %21 = vector.load %arg6[%c0_10, %c0_11, %c0_12] : memref<1x8x128xf32, #tpu.memory_space<vmem>>, vector<1x8x128xf32>
    %22 = vector.shape_cast %21 : vector<1x8x128xf32> to vector<8x128xf32>
    %23 = vector.shape_cast %20 : vector<8x128xf32> to vector<1x8x128xf32>
    tpu.vector_store %arg6[%c0_10, %c0_11, %c0_12], %23 {strides = array<i32>} : memref<1x8x128xf32, #tpu.memory_space<vmem>>, vector<1x8x128xf32>,
    return
  }
  func.func @transform_0(%arg0: i32, %arg1: i32) -> (i32, i32, i32) {
    %c0_i32 = arith.constant 0 : i32
    %c0_i32_0 = arith.constant 0 : i32
    return %arg0, %c0_i32, %arg1 : i32, i32, i32
  }
  func.func @transform_1(%arg0: i32, %arg1: i32) -> (i32, i32, i32) {
    %c1_i32 = arith.constant 1 : i32
    %0 = arith.addi %arg1, %c1_i32 : i32
    %c1_i32_0 = arith.constant 1 : i32
    %1 = arith.muli %0, %c1_i32_0 : i32
    %c0_i32 = arith.constant 0 : i32
    %c0_i32_1 = arith.constant 0 : i32
    return %arg0, %c0_i32, %1 : i32, i32, i32
  }
  func.func @transform_2(%arg0: i32, %arg1: i32) -> (i32, i32) {
    %c0_i32 = arith.constant 0 : i32
    %c0_i32_0 = arith.constant 0 : i32
    %c0_i32_1 = arith.constant 0 : i32
    return %c0_i32, %c0_i32_0 : i32, i32
  }
  func.func @transform_3(%arg0: i32, %arg1: i32) -> (i32, i32, i32) {
    %c0_i32 = arith.constant 0 : i32
    %c0_i32_0 = arith.constant 0 : i32
    return %arg0, %c0_i32, %arg1 : i32, i32, i32
  }
  func.func @transform_4(%arg0: i32, %arg1: i32) -> (i32, i32, i32) {
    %c0_i32 = arith.constant 0 : i32
    %c0_i32_0 = arith.constant 0 : i32
    return %arg0, %c0_i32, %arg1 : i32, i32, i32
  }
}

</mosaic_0001>

<llo_original>
// kernel: tpu_custom_call.1
$region0: #{tpu_custom_call.1}
  #allocation0 [shape = 'u32[]', space=smem, size = 0x4, offset = 0x4, fixed_abs, tag = 'smem constant byte address 0x4 - core index']
  #allocation1 [shape = 'u32[72,128]{1,0:T(1,128)}', space=vmem, size = 0x9000, scoped, tag = 'internal scratch']
  %s0 = inlined_call_operand.hbm [shape: f32[2,4,256], index: 0, kind: input, shape index: {}]
  %s1 = inlined_call_operand.hbm [shape: f32[2,4,256], index: 1, kind: input, shape index: {}]
  %s2 = inlined_call_operand.hbm [shape: f32[16,32], index: 2, kind: input, shape index: {}]
  %s3 = inlined_call_operand.hbm [shape: f32[2,8,128], index: 3, kind: output, shape index: {0}]
  %s4 = inlined_call_operand.hbm [shape: f32[2,8,128], index: 4, kind: output, shape index: {1}]
  %5 = xla_tuple %s3, %s4
  %s6 = sld [smem:[#allocation0]]
  $region65: #{tpu_custom_call.1} parent=0
    _
  %s8 = ssub.s32 1, %s6
  %s9 = scalar_select 0, %s8, %s6
  $region1: #{tpu_custom_call.1} parent=0
    #allocation2 [shape = 'u8[4096]{0}', space=vmem, size = 0x1000, scoped, tag = 'input window, operand 0']
    #allocation3 [shape = 's32[2]{0}', space=sflag, size = 0x8, scoped, tag = 'scoped memory for tpu_custom_call.1']
    #allocation4 [shape = 's32[2]{0}', space=sflag, size = 0x8, scoped, tag = 'scoped memory for tpu_custom_call.1']
    #allocation5 [shape = 'u8[4096]{0}', space=vmem, size = 0x1000, scoped, tag = 'input window, operand 1']
    #allocation6 [shape = 's32[2]{0}', space=sflag, size = 0x8, scoped, tag = 'scoped memory for tpu_custom_call.1']
    #allocation7 [shape = 'u8[8192]{0}', space=vmem, size = 0x2000, scoped, tag = 'input window, operand 2, single buffered']
    #allocation8 [shape = 'u8[8192]{0}', space=vmem, size = 0x2000, scoped, tag = 'output window, operand 0']
    #allocation9 [shape = 'u8[8192]{0}', space=vmem, size = 0x2000, scoped, tag = 'output window, operand 1']
    #allocation10 [shape = 's32[2]{0}', space=sflag, size = 0x8, scoped, tag = 'scoped memory for tpu_custom_call.1']
    %10 = vsyncpa [#allocation3], 0
    %s11 = scalar_lea.sflag [#allocation3], 1
    %12 = vsyncpa %s11, 0
    %13 = vsyncpa [#allocation6], 0
    %s14 = scalar_lea.sflag [#allocation6], 1
    %15 = vsyncpa %s14, 0
    %16 = vsyncpa [#allocation4], 0
    %s17 = scalar_lea.sflag [#allocation4], 1
    %18 = vsyncpa %s17, 0
    %19 = vsyncpa [#allocation10], 0
    %s20 = scalar_lea.sflag [#allocation10], 1
    %21 = vsyncpa %s20, 0
    loop: start=0, step=1, limit=4
    $region2: #{tpu_custom_call.1} parent=1 // loop_pre_header
      _
    $region3: #{tpu_custom_call.1} parent=1 // loop_header
      %s23 = sphi 0, %s27
      %p24 = scmp.ge.s32.totalorder %s23, 4
      %s30 = sphi 0, %s42
      %s31 = sphi 0, %s38
      %s32 = sphi 0, %s30
      %s33 = sphi 0, %s31
      %s34 = sphi 0, %s32
      %s35 = sphi 0, %s33
      %s47 = sphi 0, %s49
      %s50 = sphi 0, %s47
      %s51 = sphi 0, %s50
      %s67 = sphi 0, %s51
      %s77 = sphi 0, %s79
      %s80 = sphi 0, %s77
      %s81 = sphi 0, %s80
      %s97 = sphi 0, %s81
      %s101 = sphi 0, %s101
      %s103 = sphi 0, %s101
      %s104 = sphi 0, %s103
      %s118 = sphi 0, %s104
      %s126 = sphi 0, %s128
      %s129 = sphi 0, %s126
      %s130 = sphi 0, %s129
      %s146 = sphi 0, %s130
      %s154 = sphi 0, %s156
      %s157 = sphi 0, %s154
      %s158 = sphi 0, %s157
      %s174 = sphi 0, %s158
    $region4: #{tpu_custom_call.1} parent=1 // loop_header_branch
      %26 = sbr.rel (%p24) target = $region8
    $region5: #{tpu_custom_call.1} parent=1 // loop_body
      %s28 = ssub.s32 %s23, 1
      %s29 = ssub.s32 %s23, 2
      %s36 = sadd.s32 1, %s31
      %p37 = scmp.ge.s32.totalorder %s36, 1
      %s38 = scalar_select %p37, 0, %s36
      %s39 = sadd.s32 1, %s30
      %s40 = scalar_select %p37, %s39, %s30
      %p41 = scmp.ge.s32.totalorder %s40, 2
      %s42 = scalar_select %p41, 0, %s40
      %s43 = ssub.s32 %s30, %s42
      %s44 = ssub.s32 %s31, %s38
      %s45 = sor.u32 %s43, %s44
      %p46 = scmp.eq.s32.totalorder %s45, 0
      %s48 = sadd.s32 %s47, 1
      %s49 = scalar_select %p46, %s47, %s48
      %p52 = pneg %p46
      %p53 = scmp.eq.s32.totalorder %s23, 1
      %p54 = por %p52, %p53
      %p55 = scmp.ne.s32.totalorder %s47, %s50
      %p56 = scmp.eq.s32.totalorder %s23, 0
      %p57 = por %p55, %p56
      %p58 = scmp.ne.s32.totalorder %s47, %s50
      %p59 = scmp.eq.s32.totalorder %s28, 1
      %p60 = por %p58, %p59
      %p61 = scmp.ne.s32.totalorder %s50, %s51
      %p62 = scmp.eq.s32.totalorder %s28, 0
      %p63 = por %p61, %p62
      %p64 = scmp.ne.s32.totalorder %s50, %s51
      %p65 = scmp.eq.s32.totalorder %s29, 1
      %p66 = por %p64, %p65
      %p68 = scmp.ne.s32.totalorder %s51, %s67
      %p69 = scmp.eq.s32.totalorder %s29, 0
      %p70 = por %p68, %p69
      %s71 = sadd.s32 %s31, 1
      %s72 = sadd.s32 %s38, 1
      %s73 = ssub.s32 %s30, %s42
      %s74 = ssub.s32 %s71, %s72
      %s75 = sor.u32 %s73, %s74
      %p76 = scmp.eq.s32.totalorder %s75, 0
      %s78 = sadd.s32 %s77, 1
      %s79 = scalar_select %p76, %s77, %s78
      %p82 = pneg %p76
      %p83 = scmp.eq.s32.totalorder %s23, 1
      %p84 = por %p82, %p83
      %p85 = scmp.ne.s32.totalorder %s77, %s80
      %p86 = scmp.eq.s32.totalorder %s23, 0
      %p87 = por %p85, %p86
      %p88 = scmp.ne.s32.totalorder %s77, %s80
      %p89 = scmp.eq.s32.totalorder %s28, 1
      %p90 = por %p88, %p89
      %p91 = scmp.ne.s32.totalorder %s80, %s81
      %p92 = scmp.eq.s32.totalorder %s28, 0
      %p93 = por %p91, %p92
      %p94 = scmp.ne.s32.totalorder %s80, %s81
      %p95 = scmp.eq.s32.totalorder %s29, 1
      %p96 = por %p94, %p95
      %p98 = scmp.ne.s32.totalorder %s81, %s97
      %p99 = scmp.eq.s32.totalorder %s29, 0
      %p100 = por %p98, %p99
      %s102 = sadd.s32 %s101, 1
      %p105 = scmp.eq.s32.totalorder %s23, 1
      %p106 = scmp.ne.s32.totalorder %s101, %s103
      %p107 = scmp.eq.s32.totalorder %s23, 0
      %p108 = por %p106, %p107
      %p109 = scmp.ne.s32.totalorder %s101, %s103
      %p110 = scmp.eq.s32.totalorder %s28, 1
      %p111 = por %p109, %p110
      %p112 = scmp.ne.s32.totalorder %s103, %s104
      %p113 = scmp.eq.s32.totalorder %s28, 0
      %p114 = por %p112, %p113
      %p115 = scmp.ne.s32.totalorder %s103, %s104
      %p116 = scmp.eq.s32.totalorder %s29, 1
      %p117 = por %p115, %p116
      %p119 = scmp.ne.s32.totalorder %s104, %s118
      %p120 = scmp.eq.s32.totalorder %s29, 0
      %p121 = por %p119, %p120
      %s122 = ssub.s32 %s30, %s42
      %s123 = ssub.s32 %s31, %s38
      %s124 = sor.u32 %s122, %s123
      %p125 = scmp.eq.s32.totalorder %s124, 0
      %s127 = sadd.s32 %s126, 1
      %s128 = scalar_select %p125, %s126, %s127
      %p131 = pneg %p125
      %p132 = scmp.eq.s32.totalorder %s23, 1
      %p133 = por %p131, %p132
      %p134 = scmp.ne.s32.totalorder %s126, %s129
      %p135 = scmp.eq.s32.totalorder %s23, 0
      %p136 = por %p134, %p135
      %p137 = scmp.ne.s32.totalorder %s126, %s129
      %p138 = scmp.eq.s32.totalorder %s28, 1
      %p139 = por %p137, %p138
      %p140 = scmp.ne.s32.totalorder %s129, %s130
      %p141 = scmp.eq.s32.totalorder %s28, 0
      %p142 = por %p140, %p141
      %p143 = scmp.ne.s32.totalorder %s129, %s130
      %p144 = scmp.eq.s32.totalorder %s29, 1
      %p145 = por %p143, %p144
      %p147 = scmp.ne.s32.totalorder %s130, %s146
      %p148 = scmp.eq.s32.totalorder %s29, 0
      %p149 = por %p147, %p148
      %s150 = ssub.s32 %s30, %s42
      %s151 = ssub.s32 %s31, %s38
      %s152 = sor.u32 %s150, %s151
      %p153 = scmp.eq.s32.totalorder %s152, 0
      %s155 = sadd.s32 %s154, 1
      %s156 = scalar_select %p153, %s154, %s155
      %p159 = pneg %p153
      %p160 = scmp.eq.s32.totalorder %s23, 1
      %p161 = por %p159, %p160
      %p162 = scmp.ne.s32.totalorder %s154, %s157
      %p163 = scmp.eq.s32.totalorder %s23, 0
      %p164 = por %p162, %p163
      %p165 = scmp.ne.s32.totalorder %s154, %s157
      %p166 = scmp.eq.s32.totalorder %s28, 1
      %p167 = por %p165, %p166
      %p168 = scmp.ne.s32.totalorder %s157, %s158
      %p169 = scmp.eq.s32.totalorder %s28, 0
      %p170 = por %p168, %p169
      %p171 = scmp.ne.s32.totalorder %s157, %s158
      %p172 = scmp.eq.s32.totalorder %s29, 1
      %p173 = por %p171, %p172
      %p175 = scmp.ne.s32.totalorder %s158, %s174
      %p176 = scmp.eq.s32.totalorder %s29, 0
      %p177 = por %p175, %p176
      %p178 = scmp.le.s32.totalorder 1, %s23
      %p179 = scmp.lt.s32.totalorder %s23, 3
      %p180 = pnand %p178, %p179
      %p181 = pneg %p180
      // Predicated region
      $region9: #{tpu_custom_call.1} parent=5 // pred_check
        _
      $region10: #{tpu_custom_call.1} parent=5 // pred_check_branch
        %183 = sbr.rel (%p180) target = $region12
      $region11: #{tpu_custom_call.1} parent=5 // pred_region
        %s184 = ssub.s32 %s23, 1
        // Predicated region
        $region13: #{tpu_custom_call.1} parent=11 // pred_check
          %p185 = pneg %p114
        $region14: #{tpu_custom_call.1} parent=11 // pred_check_branch
          %187 = sbr.rel (%p185) target = $region16
        $region15: #{tpu_custom_call.1} parent=11 // pred_region
          %189 = vsyncadd [#allocation6], 0
          %s190 = sshll.u32 %s2, 4
          %s191 = int_to_ptr.hbm [resolvable:$true] %s190
          %s192 = sshll.u32 [#allocation7], 4
          %s193 = int_to_ptr.vmem [resolvable:$true] %s192
          %198 = dma.hbm_to_vmem [thread:$0]  %s191, 256, %s193, [#allocation6], 128, 128, 8
        $region16: #{tpu_custom_call.1} parent=11 // pred_fallthru
          _
      $region12: #{tpu_custom_call.1} parent=5 // pred_fallthru
        _
      %p199 = scmp.lt.s32.totalorder %s23, 2
      // Predicated region
      $region17: #{tpu_custom_call.1} parent=5 // pred_check
        %p200 = pneg %p199
      $region18: #{tpu_custom_call.1} parent=5 // pred_check_branch
        %202 = sbr.rel (%p200) target = $region20
      $region19: #{tpu_custom_call.1} parent=5 // pred_region
        // Predicated region
        $region21: #{tpu_custom_call.1} parent=19 // pred_check
          %p203 = pneg %p57
        $region22: #{tpu_custom_call.1} parent=19 // pred_check_branch
          %205 = sbr.rel (%p203) target = $region24
        $region23: #{tpu_custom_call.1} parent=19 // pred_region
          %s206 = sand.u32 %s47, 1
          %s207 = scalar_lea.sflag [#allocation3], %s206
          %s208 = sand.u32 %s47, 1
          %s209 = smul.addr %s208, 4
          %s210 = scalar_lea.vmem [#allocation2], %s209
          %212 = vsyncadd %s207, 0
          %s213 = smul.addr %s30, 2
          %s214 = sadd.s32 %s31, %s213
          %s215 = smul.addr %s214, 4
          %s216 = scalar_lea.hbm %s0, %s215
          %s218 = sshll.u32 %s216, 4
          %s219 = int_to_ptr.hbm [resolvable:$true] %s218
          %s220 = sshll.u32 %s210, 4
          %s221 = int_to_ptr.vmem [resolvable:$true] %s220
          %223 = dma.hbm_to_vmem [thread:$0]  %s219, 64, %s221, %s207
        $region24: #{tpu_custom_call.1} parent=19 // pred_fallthru
          _
        // Predicated region
        $region25: #{tpu_custom_call.1} parent=19 // pred_check
          %p224 = pneg %p87
        $region26: #{tpu_custom_call.1} parent=19 // pred_check_branch
          %226 = sbr.rel (%p224) target = $region28
        $region27: #{tpu_custom_call.1} parent=19 // pred_region
          %s227 = sand.u32 %s23, 1
          %s228 = scalar_lea.sflag [#allocation6], %s227
          %s229 = sand.u32 %s77, 1
          %s230 = smul.addr %s229, 4
          %s231 = scalar_lea.vmem [#allocation5], %s230
          %s232 = sadd.s32 %s31, 1
          %234 = vsyncadd %s228, 0
          %s235 = smul.addr %s30, 2
          %s236 = sadd.s32 %s232, %s235
          %s237 = smul.addr %s236, 4
          %s238 = scalar_lea.hbm %s1, %s237
          %s240 = sshll.u32 %s238, 4
          %s241 = int_to_ptr.hbm [resolvable:$true] %s240
          %s242 = sshll.u32 %s231, 4
          %s243 = int_to_ptr.vmem [resolvable:$true] %s242
          %245 = dma.hbm_to_vmem [thread:$0]  %s241, 64, %s243, %s228
        $region28: #{tpu_custom_call.1} parent=19 // pred_fallthru
          _
      $region20: #{tpu_custom_call.1} parent=5 // pred_fallthru
        _
      %p246 = scmp.le.s32.totalorder 1, %s23
      %p247 = scmp.lt.s32.totalorder %s23, 3
      %p248 = pnand %p246, %p247
      %p249 = pneg %p248
      // Predicated region
      $region29: #{tpu_custom_call.1} parent=5 // pred_check
        _
      $region30: #{tpu_custom_call.1} parent=5 // pred_check_branch
        %251 = sbr.rel (%p248) target = $region32
      $region31: #{tpu_custom_call.1} parent=5 // pred_region
        %s252 = ssub.s32 %s23, 1
        %s253 = sand.u32 %s50, 1
        %s254 = scalar_lea.sflag [#allocation3], %s253
        %s255 = sand.u32 %s50, 1
        %s256 = smul.addr %s255, 4
        %s257 = scalar_lea.vmem [#allocation2], %s256
        // Predicated region
        $region33: #{tpu_custom_call.1} parent=31 // pred_check
          %p258 = pneg %p63
        $region34: #{tpu_custom_call.1} parent=31 // pred_check_branch
          %260 = sbr.rel (%p258) target = $region36
        $region35: #{tpu_custom_call.1} parent=31 // pred_region
          %262 = dma.done %s254, 64
        $region36: #{tpu_custom_call.1} parent=31 // pred_fallthru
          _
        %s263 = sand.u32 %s28, 1
        %s264 = scalar_lea.sflag [#allocation6], %s263
        %s265 = sand.u32 %s80, 1
        %s266 = smul.addr %s265, 4
        %s267 = scalar_lea.vmem [#allocation5], %s266
        // Predicated region
        $region37: #{tpu_custom_call.1} parent=31 // pred_check
          %p268 = pneg %p93
        $region38: #{tpu_custom_call.1} parent=31 // pred_check_branch
          %270 = sbr.rel (%p268) target = $region40
        $region39: #{tpu_custom_call.1} parent=31 // pred_region
          %272 = dma.done %s264, 64
        $region40: #{tpu_custom_call.1} parent=31 // pred_fallthru
          _
        // Predicated region
        $region41: #{tpu_custom_call.1} parent=31 // pred_check
          %p273 = pneg %p114
        $region42: #{tpu_custom_call.1} parent=31 // pred_check_branch
          %275 = sbr.rel (%p273) target = $region44
        $region43: #{tpu_custom_call.1} parent=31 // pred_region
          %277 = dma.done [#allocation6], 256
        $region44: #{tpu_custom_call.1} parent=31 // pred_fallthru
          _
        %s278 = sand.u32 %s50, 1
        %s279 = scalar_lea.sflag [#allocation3], %s278
        %s280 = sand.u32 %s50, 1
        %s281 = smul.addr %s280, 4
        %s282 = scalar_lea.vmem [#allocation2], %s281
        %p283 = pneg %p63
        %p284 = pneg %p60
        %s285 = sand.u32 %s28, 1
        %s286 = scalar_lea.sflag [#allocation6], %s285
        %s287 = sand.u32 %s80, 1
        %s288 = smul.addr %s287, 4
        %s289 = scalar_lea.vmem [#allocation5], %s288
        %p290 = pneg %p93
        %p291 = pneg %p90
        %p292 = pneg %p114
        %p293 = pneg %p111
        %p294 = pneg %p142
        %p295 = pneg %p139
        %s296 = sand.u32 %s129, 1
        %s297 = scalar_lea.sflag [#allocation4], %s296
        %s298 = sand.u32 %s129, 1
        %s299 = smul.addr %s298, 8
        %s300 = scalar_lea.vmem [#allocation8], %s299
        %p301 = pneg %p170
        %p302 = pneg %p167
        %s303 = sand.u32 %s157, 1
        %s304 = scalar_lea.sflag [#allocation10], %s303
        %s305 = sand.u32 %s157, 1
        %s306 = smul.addr %s305, 8
        %s307 = scalar_lea.vmem [#allocation9], %s306
        %s308 = sadd.s32 %s33, 1
        %v309 = vld [vmem:[%s257] sm:$0xf]
        %v310 = vld [vmem:[%s267] sm:$0xf]
        %v311 = vld [vmem:[#allocation7] sm:$0xff]
        %v312 = vld [vmem:[#allocation7 + $0x8] sm:$0xff]
        %v315 = vrot.slane %v309, 4
        %v316 = vrot.slane %v310, 4
        %317 = vrot.lane.b32.xlu0 %v315, 127
        %v318 = vpop.permute.xlu0 %317
        %319 = vrot.lane.b32.xlu0 %v316, 127
        %v320 = vpop.permute.xlu0 %319
        %vm321 = vcmask 1039360
        %v322 = vsel %vm321, %v318, %v320
        %324 = vrot.lane.b32.xlu0 %v309, 126
        %v325 = vpop.permute.xlu0 %324
        %326 = vrot.lane.b32.xlu0 %v310, 126
        %v327 = vpop.permute.xlu0 %326
        %vm328 = vcmask 1031168
        %v329 = vsel %vm328, %v325, %v327
        %331 = vrot.lane.b32.xlu0 %v315, 125
        %v332 = vpop.permute.xlu0 %331
        %333 = vrot.lane.b32.xlu0 %v316, 125
        %v334 = vpop.permute.xlu0 %333
        %vm335 = vcmask 1022976
        %v336 = vsel %vm335, %v332, %v334
        %338 = vrot.lane.b32.xlu0 %v309, 124
        %v339 = vpop.permute.xlu0 %338
        %340 = vrot.lane.b32.xlu0 %v310, 124
        %v341 = vpop.permute.xlu0 %340
        %vm342 = vcmask 1014784
        %v343 = vsel %vm342, %v339, %v341
        %345 = vrot.lane.b32.xlu0 %v315, 123
        %v346 = vpop.permute.xlu0 %345
        %347 = vrot.lane.b32.xlu0 %v316, 123
        %v348 = vpop.permute.xlu0 %347
        %vm349 = vcmask 1006592
        %v350 = vsel %vm349, %v346, %v348
        %352 = vrot.lane.b32.xlu0 %v309, 122
        %v353 = vpop.permute.xlu0 %352
        %354 = vrot.lane.b32.xlu0 %v310, 122
        %v355 = vpop.permute.xlu0 %354
        %vm356 = vcmask 998400
        %v357 = vsel %vm356, %v353, %v355
        %359 = vrot.lane.b32.xlu0 %v315, 121
        %v360 = vpop.permute.xlu0 %359
        %361 = vrot.lane.b32.xlu0 %v316, 121
        %v362 = vpop.permute.xlu0 %361
        %vm363 = vcmask 990208
        %v364 = vsel %vm363, %v360, %v362
        %vm366 = vcmask 1043456
        %v367 = vsel %vm366, %v309, %v322
        %v368 = vsel %vm366, %v329, %v336
        %v369 = vsel %vm366, %v343, %v350
        %v370 = vsel %vm366, %v357, %v364
        %vm371 = vcmask 261120
        %v373 = vsel %vm371, %v311, 0
        %v376 = vsel %vm371, %v312, 0
        %378 = vmatpush.msra.mxu0 0.0
        %379 = vmatpush.msra.mxu0 0.0
        %380 = vmatpush.msra.mxu0 0.0
        %381 = vmatpush.msra.mxu0 0.0
        %382 = vmatpush.msra.mxu0 0.0
        %383 = vmatpush.msra.mxu0 0.0
        %384 = vmatpush.msra.mxu0 0.0
        %385 = vmatpush.msra.mxu0 0.0
        %386 = vmatpush.msra.mxu0 0.0
        %387 = vmatpush.msra.mxu0 0.0
        %388 = vmatpush.msra.mxu0 0.0
        %389 = vmatpush.msra.mxu0 0.0
        %390 = vmatpush.msra.mxu0 %v370
        %391 = vmatpush.msra.mxu0 %v369
        %392 = vmatpush.msra.mxu0 %v368
        %393 = vmatpush.msra.mxu0 %v367
        %394 = vmatmul.f32.gmra.mxu0 %v373
        %v395 = vpop.f32.mrf.mxu0
        %v396 = vadd.f32 0.0, %v395
        %397 = vmatmul.f32.gmra.mxu0 %v376
        %v398 = vpop.f32.mrf.mxu0
        %v399 = vadd.f32 0.0, %v398
        %400 = vdwg.mxu0
        %401 = vst [vmem:[%s300] sm:$0xff] %v396
        %402 = vst [vmem:[%s307] sm:$0xff] %v399
        %s403 = sand.u32 %s129, 1
        %s404 = scalar_lea.sflag [#allocation4], %s403
        %s405 = sand.u32 %s129, 1
        %s406 = smul.addr %s405, 8
        %s407 = scalar_lea.vmem [#allocation8], %s406
        %s408 = sand.u32 %s157, 1
        %s409 = scalar_lea.sflag [#allocation10], %s408
        %s410 = sand.u32 %s157, 1
        %s411 = smul.addr %s410, 8
        %s412 = scalar_lea.vmem [#allocation9], %s411
        // Predicated region
        $region45: #{tpu_custom_call.1} parent=31 // pred_check
          %p413 = pneg %p139
        $region46: #{tpu_custom_call.1} parent=31 // pred_check_branch
          %415 = sbr.rel (%p413) target = $region48
        $region47: #{tpu_custom_call.1} parent=31 // pred_region
          %417 = vsyncadd %s404, 0
          %s418 = sadd.s32 %s33, %s32
          %s419 = smul.addr %s418, 8
          %s420 = scalar_lea.hbm %s3, %s419
          %s422 = sshll.u32 %s407, 4
          %s423 = int_to_ptr.vmem [resolvable:$true] %s422
          %s424 = sshll.u32 %s420, 4
          %s425 = int_to_ptr.hbm [resolvable:$true] %s424
          %427 = dma.vmem_to_hbm [thread:$0]  %s423, 128, %s425, %s404
        $region48: #{tpu_custom_call.1} parent=31 // pred_fallthru
          _
        // Predicated region
        $region49: #{tpu_custom_call.1} parent=31 // pred_check
          %p428 = pneg %p167
        $region50: #{tpu_custom_call.1} parent=31 // pred_check_branch
          %430 = sbr.rel (%p428) target = $region52
        $region51: #{tpu_custom_call.1} parent=31 // pred_region
          %432 = vsyncadd %s409, 0
          %s433 = sadd.s32 %s33, %s32
          %s434 = smul.addr %s433, 8
          %s435 = scalar_lea.hbm %s4, %s434
          %s437 = sshll.u32 %s412, 4
          %s438 = int_to_ptr.vmem [resolvable:$true] %s437
          %s439 = sshll.u32 %s435, 4
          %s440 = int_to_ptr.hbm [resolvable:$true] %s439
          %442 = dma.vmem_to_hbm [thread:$0]  %s438, 128, %s440, %s409
        $region52: #{tpu_custom_call.1} parent=31 // pred_fallthru
          _
      $region32: #{tpu_custom_call.1} parent=5 // pred_fallthru
        _
      %p443 = scmp.le.s32.totalorder 2, %s23
      // Predicated region
      $region53: #{tpu_custom_call.1} parent=5 // pred_check
        %p444 = pneg %p443
      $region54: #{tpu_custom_call.1} parent=5 // pred_check_branch
        %446 = sbr.rel (%p444) target = $region56
      $region55: #{tpu_custom_call.1} parent=5 // pred_region
        %s447 = ssub.s32 %s23, 2
        // Predicated region
        $region57: #{tpu_custom_call.1} parent=55 // pred_check
          %p448 = pneg %p145
        $region58: #{tpu_custom_call.1} parent=55 // pred_check_branch
          %450 = sbr.rel (%p448) target = $region60
        $region59: #{tpu_custom_call.1} parent=55 // pred_region
          %s451 = sand.u32 %s130, 1
          %s452 = scalar_lea.sflag [#allocation4], %s451
          %s453 = sand.u32 %s130, 1
          %s454 = smul.addr %s453, 8
          %s455 = scalar_lea.vmem [#allocation8], %s454
          %457 = dma.done %s452, 128
        $region60: #{tpu_custom_call.1} parent=55 // pred_fallthru
          _
        // Predicated region
        $region61: #{tpu_custom_call.1} parent=55 // pred_check
          %p458 = pneg %p173
        $region62: #{tpu_custom_call.1} parent=55 // pred_check_branch
          %460 = sbr.rel (%p458) target = $region64
        $region63: #{tpu_custom_call.1} parent=55 // pred_region
          %s461 = sand.u32 %s158, 1
          %s462 = scalar_lea.sflag [#allocation10], %s461
          %s463 = sand.u32 %s158, 1
          %s464 = smul.addr %s463, 8
          %s465 = scalar_lea.vmem [#allocation9], %s464
          %467 = dma.done %s462, 128
        $region64: #{tpu_custom_call.1} parent=55 // pred_fallthru
          _
      $region56: #{tpu_custom_call.1} parent=5 // pred_fallthru
        _
    $region6: #{tpu_custom_call.1} parent=1 // loop_footer
      %s27 = sadd.s32 1, %s23
    $region7: #{tpu_custom_call.1} parent=1 // loop_footer_branch
      %22 = sbr.rel target = $region3
    $region8: #{tpu_custom_call.1} parent=1 // loop_exit
      _
    %468 = vsyncpa [#allocation3], 1
    %s469 = scalar_lea.sflag [#allocation3], 1
    %470 = vsyncpa %s469, 1
    %471 = vsyncpa [#allocation6], 1
    %s472 = scalar_lea.sflag [#allocation6], 1
    %473 = vsyncpa %s472, 1
    %474 = vsyncpa [#allocation4], 1
    %s475 = scalar_lea.sflag [#allocation4], 1
    %476 = vsyncpa %s475, 1
    %477 = vsyncpa [#allocation10], 1
    %s478 = scalar_lea.sflag [#allocation10], 1
    %479 = vsyncpa %s478, 1

</llo_original>
